<compile_context>
chip_gen: v5e
topology: v5e:2x2
jax: 0.10.0
libtpu: 0.0.40
codegen_flags: <defaults>
</compile_context>

<pallas_src>
import jax
import jax.numpy as jnp
from jax.experimental import pallas as pl
from jax.experimental.pallas import tpu as pltpu


def _head_kernel(x_ref, scale_ref, shift_ref, w_ref, b_ref, o_ref):
    # x_ref:     (TB, FD)  activation tile, input dtype (f32 or bf16)
    # scale_ref: (1, FD)   folded BN scale, f32 (VMEM-resident)
    # shift_ref: (1, FD)   folded BN shift, f32 (VMEM-resident)
    # w_ref:     (FD, 1)   fc1 weight column, f32 (VMEM-resident)
    # b_ref:     (1,)      fc1 bias scalar (SMEM)
    # o_ref:     (TB, 1)   output tile
    #
    # BatchNorm1d (inference, folded affine) + ReLU; Dropout = identity in eval.
    # dtype promotion to f32 happens per-vreg inside this fused expression.
    y = jnp.maximum(x_ref[...] * scale_ref[...] + shift_ref[...], 0.0)   # (TB, FD) f32
    # Linear(F*D -> 1): fused multiply + full reduction as an MXU matvec.
    acc = jnp.dot(y, w_ref[...], preferred_element_type=jnp.float32)     # (TB, 1)
    o_ref[...] = acc + b_ref[0]


def _choose_tb(B, tb_max=1024):
    """Pick a batch-tile size: <= tb_max, multiple of 8 (layout), minimal dead
    rows for ragged B, and >= 2 grid steps when B is large (megacore)."""
    if B <= 8:
        return B                      # single full-extent block (layout-legal)
    num_tiles = max(2, pl.cdiv(B, tb_max))
    tb = (B + num_tiles - 1) // num_tiles
    tb = ((tb + 7) // 8) * 8          # round up to sublane multiple
    return min(tb, tb_max)


def energy_prediction_head(x, gamma, beta, running_mean, running_var,
                           w_fc1, b_fc1, eps=1e-5, tb_max=1024):
    """x: (B, F, D) f32 or bf16.  Returns (B, 1) float32."""
    B, F, D = x.shape
    FD = F * D

    # Fold BatchNorm1d (inference) into a per-channel affine, then broadcast to
    # per-element (1, FD) rows (tiny, stays VMEM-resident across grid steps).
    inv_std = jax.lax.rsqrt(running_var.astype(jnp.float32) + eps)
    scale = gamma.astype(jnp.float32) * inv_std                        # (F,)
    shift = beta.astype(jnp.float32) - running_mean.astype(jnp.float32) * scale
    scale_row = jnp.broadcast_to(scale[:, None], (F, D)).reshape(1, FD)
    shift_row = jnp.broadcast_to(shift[:, None], (F, D)).reshape(1, FD)

    # PyTorch Linear weight is (1, F*D); reshape(B, -1) flattens (F, D)
    # row-major, so the (FD, 1) column matches element-for-element.
    w_col = w_fc1.reshape(FD, 1).astype(jnp.float32)
    b = b_fc1.reshape(1).astype(jnp.float32)

    # Flatten activations to (B, FD) - a free view of a contiguous array.
    # Kept in the caller's dtype (bf16 halves HBM traffic for this mem-bound
    # kernel); promotion to f32 happens inside the kernel per-vreg.
    x2 = x.reshape(B, FD)

    TB = _choose_tb(B, tb_max)
    num_tiles = pl.cdiv(B, TB)        # no jnp.pad: partial last block is masked
                                      # on writeback; see INVARIANT in header.

    x_spec = pl.BlockSpec((TB, FD), lambda i: (i, 0))
    if TB <= 256 and num_tiles >= 3:
        # Small tiles expose DMA issue latency; deepen the input pipeline.
        x_spec = pl.BlockSpec((TB, FD), lambda i: (i, 0),
                              pipeline_mode=pl.Buffered(3))

    flops = int(5 * B * FD)                                   # affine+relu+matvec
    bytes_accessed = int(B * FD * x.dtype.itemsize            # activations
                         + 3 * FD * 4 + 4                     # scale/shift/w/bias
                         + B * 4)                             # output

    out = pl.pallas_call(
        _head_kernel,
        out_shape=jax.ShapeDtypeStruct((B, 1), jnp.float32),
        grid=(num_tiles,),
        in_specs=[
            x_spec,                                               # streamed tile
            pl.BlockSpec((1, FD), lambda i: (0, 0)),              # scale (resident)
            pl.BlockSpec((1, FD), lambda i: (0, 0)),              # shift (resident)
            pl.BlockSpec((FD, 1), lambda i: (0, 0)),              # weight (resident)
            pl.BlockSpec(memory_space=pltpu.MemorySpace.SMEM),    # bias scalar
        ],
        out_specs=pl.BlockSpec((TB, 1), lambda i: (i, 0)),
        compiler_params=pltpu.CompilerParams(
            dimension_semantics=("parallel",),
            vmem_limit_bytes=48 * 1024 * 1024),
        cost_estimate=pl.CostEstimate(
            flops=flops, transcendentals=0, bytes_accessed=bytes_accessed),
    )(x2, scale_row, shift_row, w_col, b)

    return out


def reference(x, gamma, beta, running_mean, running_var, w_fc1, b_fc1, eps=1e-5):
    inv_std = 1.0 / jnp.sqrt(running_var + eps)
    y = (x - running_mean[None, :, None]) * inv_std[None, :, None]
    y = y * gamma[None, :, None] + beta[None, :, None]
    y = jnp.maximum(y, 0.0)
    B = x.shape[0]
    return y.reshape(B, -1) @ w_fc1.reshape(-1, 1) + b_fc1


if __name__ == "__main__":
    # Shapes consistent with the module: d_model=256, feat_dim=8.
    F, D = 8, 256
    key = jax.random.PRNGKey(0)
    kg, kb, km, kv, kw, kbias, kx1, kx2 = jax.random.split(key, 8)

    # Deterministic synthetic parameters (BatchNorm1d(F) + Linear(F*D, 1)).
    gamma = 1.0 + 0.1 * jax.random.normal(kg, (F,), dtype=jnp.float32)
    beta = 0.1 * jax.random.normal(kb, (F,), dtype=jnp.float32)
    running_mean = 0.05 * jax.random.normal(km, (F,), dtype=jnp.float32)
    running_var = 1.0 + 0.1 * jax.nn.softplus(
        jax.random.normal(kv, (F,), dtype=jnp.float32))
    w_fc1 = (jax.random.normal(kw, (1, F * D), dtype=jnp.float32)
             / jnp.sqrt(F * D))
    b_fc1 = 0.01 * jax.random.normal(kbias, (1,), dtype=jnp.float32)

    # TODO(synk): training-mode dropout / batch-statistics BN not modeled
    # (inference semantics used: dropout = identity, BN uses running stats).

    # Case 1: small batch (single tile).
    B1 = 4
    x1 = jax.random.normal(kx1, (B1, F, D), dtype=jnp.float32)
    out1 = jax.block_until_ready(
        energy_prediction_head(x1, gamma, beta, running_mean, running_var,
                               w_fc1, b_fc1))
    ref1 = reference(x1, gamma, beta, running_mean, running_var, w_fc1, b_fc1)
    assert out1.shape == (B1, 1), out1.shape
    assert jnp.allclose(out1, ref1, atol=1e-4, rtol=1e-4), (out1, ref1)

    # Case 2: ragged batch (multi-tile grid with a partial, unpadded last block).
    B2 = 20
    x2 = jax.random.normal(kx2, (B2, F, D), dtype=jnp.float32)
    out2 = jax.block_until_ready(
        energy_prediction_head(x2, gamma, beta, running_mean, running_var,
                               w_fc1, b_fc1))
    ref2 = reference(x2, gamma, beta, running_mean, running_var, w_fc1, b_fc1)
    assert out2.shape == (B2, 1), out2.shape
    assert jnp.allclose(out2, ref2, atol=1e-4, rtol=1e-4), (out2, ref2)

    print("KERNEL_OK")
</pallas_src>

<mosaic_0001>
module attributes {stable_mosaic.version = 11 : i64} {
  func.func @_head_kernel(%arg0: i32, %arg1: memref<4x2048xf32, #tpu.memory_space<vmem>>, %arg2: memref<1x2048xf32, #tpu.memory_space<vmem>>, %arg3: memref<1x2048xf32, #tpu.memory_space<vmem>>, %arg4: memref<2048x1xf32, #tpu.memory_space<vmem>>, %arg5: memref<1xf32, #tpu.memory_space<smem>>, %arg6: memref<4x1xf32, #tpu.memory_space<vmem>>) attributes {dimension_semantics = [#tpu.dimension_semantics<parallel>], iteration_bounds = array<i64: 1>, scalar_prefetch = 0 : i64, scratch_operands = 0 : i64, tpu.core_type = #tpu.core_type<tc>, window_params = [{transform_indices = @transform_0, window_bounds = array<i64: 4, 2048>}, {pipeline_mode = #tpu.pipeline_mode<synchronous>, transform_indices = @transform_1, window_bounds = array<i64: 1, 2048>}, {pipeline_mode = #tpu.pipeline_mode<synchronous>, transform_indices = @transform_2, window_bounds = array<i64: 1, 2048>}, {pipeline_mode = #tpu.pipeline_mode<synchronous>, transform_indices = @transform_3, window_bounds = array<i64: 2048, 1>}, {transform_indices = @transform_4, window_bounds = array<i64: 1>}, {transform_indices = @transform_5, window_bounds = array<i64: 4, 1>}]} {
    %c0 = arith.constant 0 : index
    %c0_0 = arith.constant 0 : index
    %0 = vector.load %arg1[%c0, %c0_0] : memref<4x2048xf32, #tpu.memory_space<vmem>>, vector<4x2048xf32>
    %c0_1 = arith.constant 0 : index
    %c0_2 = arith.constant 0 : index
    %1 = vector.load %arg2[%c0_1, %c0_2] : memref<1x2048xf32, #tpu.memory_space<vmem>>, vector<1x2048xf32>
    %2 = vector.broadcast %1 : vector<1x2048xf32> to vector<4x2048xf32>
    %3 = arith.mulf %0, %2 : vector<4x2048xf32>
    %c0_3 = arith.constant 0 : index
    %c0_4 = arith.constant 0 : index
    %4 = vector.load %arg3[%c0_3, %c0_4] : memref<1x2048xf32, #tpu.memory_space<vmem>>, vector<1x2048xf32>
    %5 = vector.broadcast %4 : vector<1x2048xf32> to vector<4x2048xf32>
    %6 = arith.addf %3, %5 : vector<4x2048xf32>
    %cst = arith.constant 0.000000e+00 : f32
    %7 = vector.broadcast %cst : f32 to vector<4x2048xf32>
    %8 = arith.maximumf %6, %7 : vector<4x2048xf32>
    %c0_5 = arith.constant 0 : index
    %c0_6 = arith.constant 0 : index
    %9 = vector.load %arg4[%c0_5, %c0_6] : memref<2048x1xf32, #tpu.memory_space<vmem>>, vector<2048x1xf32>
    %cst_7 = arith.constant dense<0.000000e+00> : vector<4x1xf32>
    %10 = tpu.matmul %8, %9, %cst_7 {dimension_numbers = #tpu.dot_dimension_numbers<[1], [0], [0], [1], [0, 0, 1, 1], [], []>} : vector<4x2048xf32>, vector<2048x1xf32>, vector<4x1xf32> -> vector<4x1xf32>
    %c0_8 = arith.constant 0 : index
    %11 = memref.load %arg5[%c0_8] : memref<1xf32, #tpu.memory_space<smem>>
    %12 = vector.broadcast %11 : f32 to vector<4x1xf32>
    %13 = arith.addf %10, %12 : vector<4x1xf32>
    %c0_9 = arith.constant 0 : index
    %c0_10 = arith.constant 0 : index
    %14 = vector.load %arg6[%c0_9, %c0_10] : memref<4x1xf32, #tpu.memory_space<vmem>>, vector<4x1xf32>
    tpu.vector_store %arg6[%c0_9, %c0_10], %13 {strides = array<i32>} : memref<4x1xf32, #tpu.memory_space<vmem>>, vector<4x1xf32>,
    return
  }
  func.func @transform_0(%arg0: i32) -> (i32, i32) {
    %c0_i32 = arith.constant 0 : i32
    %c0_i32_0 = arith.constant 0 : i32
    return %arg0, %c0_i32 : i32, i32
  }
  func.func @transform_1(%arg0: i32) -> (i32, i32) {
    %c0_i32 = arith.constant 0 : i32
    %c0_i32_0 = arith.constant 0 : i32
    %c0_i32_1 = arith.constant 0 : i32
    return %c0_i32, %c0_i32_0 : i32, i32
  }
  func.func @transform_2(%arg0: i32) -> (i32, i32) {
    %c0_i32 = arith.constant 0 : i32
    %c0_i32_0 = arith.constant 0 : i32
    %c0_i32_1 = arith.constant 0 : i32
    return %c0_i32, %c0_i32_0 : i32, i32
  }
  func.func @transform_3(%arg0: i32) -> (i32, i32) {
    %c0_i32 = arith.constant 0 : i32
    %c0_i32_0 = arith.constant 0 : i32
    %c0_i32_1 = arith.constant 0 : i32
    return %c0_i32, %c0_i32_0 : i32, i32
  }
  func.func @transform_4(%arg0: i32) -> i32 {
    %c0_i32 = arith.constant 0 : i32
    %c0_i32_0 = arith.constant 0 : i32
    return %c0_i32 : i32
  }
  func.func @transform_5(%arg0: i32) -> (i32, i32) {
    %c0_i32 = arith.constant 0 : i32
    %c0_i32_0 = arith.constant 0 : i32
    return %arg0, %c0_i32 : i32, i32
  }
}

</mosaic_0001>

<llo_original>
// kernel: tpu_custom_call.1
$region0: #{tpu_custom_call.1}
  #allocation0 [shape = 'u32[]', space=smem, size = 0x4, offset = 0x4, fixed_abs, tag = 'smem constant byte address 0x4 - core index']
  #allocation1 [shape = 'u32[72,128]{1,0:T(1,128)}', space=vmem, size = 0x9000, scoped, tag = 'internal scratch']
  #allocation2 [shape = 'f32[1]{0:T(128)S(6)}', space=smem, size = 0x200, scoped, tag = 'scoped memory for tpu_custom_call.1']
  %s0 = inlined_call_operand.vmem [shape: f32[4,2048], index: 0, kind: input, shape index: {}]
  %s1 = inlined_call_operand.vmem [shape: f32[1,2048], index: 1, kind: input, shape index: {}]
  %s2 = inlined_call_operand.vmem [shape: f32[1,2048], index: 2, kind: input, shape index: {}]
  %s3 = inlined_call_operand.vmem [shape: f32[2048,1], index: 3, kind: input, shape index: {}]
  %s4 = inlined_call_operand.<no memory space> [shape: f32[1], index: 4, kind: input, shape index: {}]
  %s5 = inlined_call_operand.vmem [shape: f32[4,1], index: 5, kind: output, shape index: {}]
  %s6 = sld [smem:[#allocation0]]
  $region30: #{tpu_custom_call.1} parent=0
    _
  %s8 = ssub.s32 1, %s6
  %s9 = scalar_select 0, %s8, %s6
  %10 = sst [smem:[#allocation2]] %s4
  // Predicated region
  $region2: #{tpu_custom_call.1} parent=0 // pred_check
    _
  $region3: #{tpu_custom_call.1} parent=0 // pred_check_branch
    %12 = sbr.rel (0) target = $region5
  $region4: #{tpu_custom_call.1} parent=0 // pred_region
    _
  $region5: #{tpu_custom_call.1} parent=0 // pred_fallthru
    _
  // Predicated region
  $region6: #{tpu_custom_call.1} parent=0 // pred_check
    _
  $region7: #{tpu_custom_call.1} parent=0 // pred_check_branch
    %14 = sbr.rel (0) target = $region9
  $region8: #{tpu_custom_call.1} parent=0 // pred_region
    _
  $region9: #{tpu_custom_call.1} parent=0 // pred_fallthru
    _
  // Predicated region
  $region10: #{tpu_custom_call.1} parent=0 // pred_check
    _
  $region11: #{tpu_custom_call.1} parent=0 // pred_check_branch
    %16 = sbr.rel (0) target = $region13
  $region12: #{tpu_custom_call.1} parent=0 // pred_region
    _
  $region13: #{tpu_custom_call.1} parent=0 // pred_fallthru
    _
  // Predicated region
  $region14: #{tpu_custom_call.1} parent=0 // pred_check
    _
  $region15: #{tpu_custom_call.1} parent=0 // pred_check_branch
    %18 = sbr.rel (0) target = $region17
  $region16: #{tpu_custom_call.1} parent=0 // pred_region
    _
  $region17: #{tpu_custom_call.1} parent=0 // pred_fallthru
    _
  // Predicated region
  $region18: #{tpu_custom_call.1} parent=0 // pred_check
    _
  $region19: #{tpu_custom_call.1} parent=0 // pred_check_branch
    %20 = sbr.rel (0) target = $region21
  $region20: #{tpu_custom_call.1} parent=0 // pred_region
    _
  $region21: #{tpu_custom_call.1} parent=0 // pred_fallthru
    _
  %v21 = vld [vmem:[%s0] sm:$0xff]
  %v22 = vld [vmem:[%s0 + $0x8] sm:$0xff]
  %v23 = vld [vmem:[%s0 + $0x10] sm:$0xff]
  %v24 = vld [vmem:[%s0 + $0x18] sm:$0xff]
  %v25 = vld [vmem:[%s0 + $0x20] sm:$0xff]
  %v26 = vld [vmem:[%s0 + $0x28] sm:$0xff]
  %v27 = vld [vmem:[%s0 + $0x30] sm:$0xff]
  %v28 = vld [vmem:[%s0 + $0x38] sm:$0xff]
  %v29 = vld [vmem:[%s1] sm:$0xff]
  %v30 = vld [vmem:[%s1 + $0x8] sm:$0xff]
  %v33 = vperm.slane %v29, 0
  %v34 = vperm.slane %v29, 1
  %v35 = vperm.slane %v29, 2
  %v36 = vperm.slane %v29, 3
  %v37 = vperm.slane %v29, 4
  %v38 = vperm.slane %v29, 5
  %v39 = vperm.slane %v29, 6
  %v40 = vperm.slane %v29, 7
  %v41 = vperm.slane %v30, 0
  %v42 = vperm.slane %v30, 1
  %v43 = vperm.slane %v30, 2
  %v44 = vperm.slane %v30, 3
  %v45 = vperm.slane %v30, 4
  %v46 = vperm.slane %v30, 5
  %v47 = vperm.slane %v30, 6
  %v48 = vperm.slane %v30, 7
  %v49 = vrot.slane %v34, 4
  %v50 = vrot.slane %v36, 4
  %v51 = vrot.slane %v38, 4
  %v52 = vrot.slane %v40, 4
  %v53 = vrot.slane %v42, 4
  %v54 = vrot.slane %v44, 4
  %v55 = vrot.slane %v46, 4
  %v56 = vrot.slane %v48, 4
  %vm57 = vcmask 1043456
  %v58 = vsel %vm57, %v33, %v49
  %v59 = vsel %vm57, %v35, %v50
  %v60 = vsel %vm57, %v37, %v51
  %v61 = vsel %vm57, %v39, %v52
  %v62 = vsel %vm57, %v41, %v53
  %v63 = vsel %vm57, %v43, %v54
  %v64 = vsel %vm57, %v45, %v55
  %v65 = vsel %vm57, %v47, %v56
  %v74 = vmul.f32 %v21, %v58
  %v75 = vmul.f32 %v22, %v59
  %v76 = vmul.f32 %v23, %v60
  %v77 = vmul.f32 %v24, %v61
  %v78 = vmul.f32 %v25, %v62
  %v79 = vmul.f32 %v26, %v63
  %v80 = vmul.f32 %v27, %v64
  %v81 = vmul.f32 %v28, %v65
  %v82 = vld [vmem:[%s2] sm:$0xff]
  %v83 = vld [vmem:[%s2 + $0x8] sm:$0xff]
  %v86 = vperm.slane %v82, 0
  %v87 = vperm.slane %v82, 1
  %v88 = vperm.slane %v82, 2
  %v89 = vperm.slane %v82, 3
  %v90 = vperm.slane %v82, 4
  %v91 = vperm.slane %v82, 5
  %v92 = vperm.slane %v82, 6
  %v93 = vperm.slane %v82, 7
  %v94 = vperm.slane %v83, 0
  %v95 = vperm.slane %v83, 1
  %v96 = vperm.slane %v83, 2
  %v97 = vperm.slane %v83, 3
  %v98 = vperm.slane %v83, 4
  %v99 = vperm.slane %v83, 5
  %v100 = vperm.slane %v83, 6
  %v101 = vperm.slane %v83, 7
  %v102 = vrot.slane %v87, 4
  %v103 = vrot.slane %v89, 4
  %v104 = vrot.slane %v91, 4
  %v105 = vrot.slane %v93, 4
  %v106 = vrot.slane %v95, 4
  %v107 = vrot.slane %v97, 4
  %v108 = vrot.slane %v99, 4
  %v109 = vrot.slane %v101, 4
  %v110 = vsel %vm57, %v86, %v102
  %v111 = vsel %vm57, %v88, %v103
  %v112 = vsel %vm57, %v90, %v104
  %v113 = vsel %vm57, %v92, %v105
  %v114 = vsel %vm57, %v94, %v106
  %v115 = vsel %vm57, %v96, %v107
  %v116 = vsel %vm57, %v98, %v108
  %v117 = vsel %vm57, %v100, %v109
  %v126 = vadd.f32 %v74, %v110
  %v127 = vadd.f32 %v75, %v111
  %v128 = vadd.f32 %v76, %v112
  %v129 = vadd.f32 %v77, %v113
  %v130 = vadd.f32 %v78, %v114
  %v131 = vadd.f32 %v79, %v115
  %v132 = vadd.f32 %v80, %v116
  %v133 = vadd.f32 %v81, %v117
  %v134 = vmax.f32 %v126, 0.0
  %v135 = vmax.f32 %v127, 0.0
  %v136 = vmax.f32 %v128, 0.0
  %v137 = vmax.f32 %v129, 0.0
  %v138 = vmax.f32 %v130, 0.0
  %v139 = vmax.f32 %v131, 0.0
  %v140 = vmax.f32 %v132, 0.0
  %v141 = vmax.f32 %v133, 0.0
  %v142 = vld [vmem:[%s3] sm:$0xff]
  %v143 = vld [vmem:[%s3 + $0x8] sm:$0xff]
  %v144 = vld [vmem:[%s3 + $0x10] sm:$0xff]
  %v145 = vld [vmem:[%s3 + $0x18] sm:$0xff]
  %v146 = vld [vmem:[%s3 + $0x20] sm:$0xff]
  %v147 = vld [vmem:[%s3 + $0x28] sm:$0xff]
  %v148 = vld [vmem:[%s3 + $0x30] sm:$0xff]
  %v149 = vld [vmem:[%s3 + $0x38] sm:$0xff]
  %v150 = vld [vmem:[%s3 + $0x40] sm:$0xff]
  %v151 = vld [vmem:[%s3 + $0x48] sm:$0xff]
  %v152 = vld [vmem:[%s3 + $0x50] sm:$0xff]
  %v153 = vld [vmem:[%s3 + $0x58] sm:$0xff]
  %v154 = vld [vmem:[%s3 + $0x60] sm:$0xff]
  %v155 = vld [vmem:[%s3 + $0x68] sm:$0xff]
  %v156 = vld [vmem:[%s3 + $0x70] sm:$0xff]
  %v157 = vld [vmem:[%s3 + $0x78] sm:$0xff]
  %v158 = vld [vmem:[%s3 + $0x80] sm:$0xff]
  %v159 = vld [vmem:[%s3 + $0x88] sm:$0xff]
  %v160 = vld [vmem:[%s3 + $0x90] sm:$0xff]
  %v161 = vld [vmem:[%s3 + $0x98] sm:$0xff]
  %v162 = vld [vmem:[%s3 + $0xa0] sm:$0xff]
  %v163 = vld [vmem:[%s3 + $0xa8] sm:$0xff]
  %v164 = vld [vmem:[%s3 + $0xb0] sm:$0xff]
  %v165 = vld [vmem:[%s3 + $0xb8] sm:$0xff]
  %v166 = vld [vmem:[%s3 + $0xc0] sm:$0xff]
  %v167 = vld [vmem:[%s3 + $0xc8] sm:$0xff]
  %v168 = vld [vmem:[%s3 + $0xd0] sm:$0xff]
  %v169 = vld [vmem:[%s3 + $0xd8] sm:$0xff]
  %v170 = vld [vmem:[%s3 + $0xe0] sm:$0xff]
  %v171 = vld [vmem:[%s3 + $0xe8] sm:$0xff]
  %v172 = vld [vmem:[%s3 + $0xf0] sm:$0xff]
  %v173 = vld [vmem:[%s3 + $0xf8] sm:$0xff]
  %v174 = vld [vmem:[%s3 + $0x100] sm:$0xff]
  %v175 = vld [vmem:[%s3 + $0x108] sm:$0xff]
  %v176 = vld [vmem:[%s3 + $0x110] sm:$0xff]
  %v177 = vld [vmem:[%s3 + $0x118] sm:$0xff]
  %v178 = vld [vmem:[%s3 + $0x120] sm:$0xff]
  %v179 = vld [vmem:[%s3 + $0x128] sm:$0xff]
  %v180 = vld [vmem:[%s3 + $0x130] sm:$0xff]
  %v181 = vld [vmem:[%s3 + $0x138] sm:$0xff]
  %v182 = vld [vmem:[%s3 + $0x140] sm:$0xff]
  %v183 = vld [vmem:[%s3 + $0x148] sm:$0xff]
  %v184 = vld [vmem:[%s3 + $0x150] sm:$0xff]
  %v185 = vld [vmem:[%s3 + $0x158] sm:$0xff]
  %v186 = vld [vmem:[%s3 + $0x160] sm:$0xff]
  %v187 = vld [vmem:[%s3 + $0x168] sm:$0xff]
  %v188 = vld [vmem:[%s3 + $0x170] sm:$0xff]
  %v189 = vld [vmem:[%s3 + $0x178] sm:$0xff]
  %v190 = vld [vmem:[%s3 + $0x180] sm:$0xff]
  %v191 = vld [vmem:[%s3 + $0x188] sm:$0xff]
  %v192 = vld [vmem:[%s3 + $0x190] sm:$0xff]
  %v193 = vld [vmem:[%s3 + $0x198] sm:$0xff]
  %v194 = vld [vmem:[%s3 + $0x1a0] sm:$0xff]
  %v195 = vld [vmem:[%s3 + $0x1a8] sm:$0xff]
  %v196 = vld [vmem:[%s3 + $0x1b0] sm:$0xff]
  %v197 = vld [vmem:[%s3 + $0x1b8] sm:$0xff]
  %v198 = vld [vmem:[%s3 + $0x1c0] sm:$0xff]
  %v199 = vld [vmem:[%s3 + $0x1c8] sm:$0xff]
  %v200 = vld [vmem:[%s3 + $0x1d0] sm:$0xff]
  %v201 = vld [vmem:[%s3 + $0x1d8] sm:$0xff]
  %v202 = vld [vmem:[%s3 + $0x1e0] sm:$0xff]
  %v203 = vld [vmem:[%s3 + $0x1e8] sm:$0xff]
  %v204 = vld [vmem:[%s3 + $0x1f0] sm:$0xff]
  %v205 = vld [vmem:[%s3 + $0x1f8] sm:$0xff]
  %v206 = vld [vmem:[%s3 + $0x200] sm:$0xff]
  %v207 = vld [vmem:[%s3 + $0x208] sm:$0xff]
  %v208 = vld [vmem:[%s3 + $0x210] sm:$0xff]
  %v209 = vld [vmem:[%s3 + $0x218] sm:$0xff]
  %v210 = vld [vmem:[%s3 + $0x220] sm:$0xff]
  %v211 = vld [vmem:[%s3 + $0x228] sm:$0xff]
  %v212 = vld [vmem:[%s3 + $0x230] sm:$0xff]
  %v213 = vld [vmem:[%s3 + $0x238] sm:$0xff]
  %v214 = vld [vmem:[%s3 + $0x240] sm:$0xff]
  %v215 = vld [vmem:[%s3 + $0x248] sm:$0xff]
  %v216 = vld [vmem:[%s3 + $0x250] sm:$0xff]
  %v217 = vld [vmem:[%s3 + $0x258] sm:$0xff]
  %v218 = vld [vmem:[%s3 + $0x260] sm:$0xff]
  %v219 = vld [vmem:[%s3 + $0x268] sm:$0xff]
  %v220 = vld [vmem:[%s3 + $0x270] sm:$0xff]
  %v221 = vld [vmem:[%s3 + $0x278] sm:$0xff]
  %v222 = vld [vmem:[%s3 + $0x280] sm:$0xff]
  %v223 = vld [vmem:[%s3 + $0x288] sm:$0xff]
  %v224 = vld [vmem:[%s3 + $0x290] sm:$0xff]
  %v225 = vld [vmem:[%s3 + $0x298] sm:$0xff]
  %v226 = vld [vmem:[%s3 + $0x2a0] sm:$0xff]
  %v227 = vld [vmem:[%s3 + $0x2a8] sm:$0xff]
  %v228 = vld [vmem:[%s3 + $0x2b0] sm:$0xff]
  %v229 = vld [vmem:[%s3 + $0x2b8] sm:$0xff]
  %v230 = vld [vmem:[%s3 + $0x2c0] sm:$0xff]
  %v231 = vld [vmem:[%s3 + $0x2c8] sm:$0xff]
  %v232 = vld [vmem:[%s3 + $0x2d0] sm:$0xff]
  %v233 = vld [vmem:[%s3 + $0x2d8] sm:$0xff]
  %v234 = vld [vmem:[%s3 + $0x2e0] sm:$0xff]
  %v235 = vld [vmem:[%s3 + $0x2e8] sm:$0xff]
  %v236 = vld [vmem:[%s3 + $0x2f0] sm:$0xff]
  %v237 = vld [vmem:[%s3 + $0x2f8] sm:$0xff]
  %v238 = vld [vmem:[%s3 + $0x300] sm:$0xff]
  %v239 = vld [vmem:[%s3 + $0x308] sm:$0xff]
  %v240 = vld [vmem:[%s3 + $0x310] sm:$0xff]
  %v241 = vld [vmem:[%s3 + $0x318] sm:$0xff]
  %v242 = vld [vmem:[%s3 + $0x320] sm:$0xff]
  %v243 = vld [vmem:[%s3 + $0x328] sm:$0xff]
  %v244 = vld [vmem:[%s3 + $0x330] sm:$0xff]
  %v245 = vld [vmem:[%s3 + $0x338] sm:$0xff]
  %v246 = vld [vmem:[%s3 + $0x340] sm:$0xff]
  %v247 = vld [vmem:[%s3 + $0x348] sm:$0xff]
  %v248 = vld [vmem:[%s3 + $0x350] sm:$0xff]
  %v249 = vld [vmem:[%s3 + $0x358] sm:$0xff]
  %v250 = vld [vmem:[%s3 + $0x360] sm:$0xff]
  %v251 = vld [vmem:[%s3 + $0x368] sm:$0xff]
  %v252 = vld [vmem:[%s3 + $0x370] sm:$0xff]
  %v253 = vld [vmem:[%s3 + $0x378] sm:$0xff]
  %v254 = vld [vmem:[%s3 + $0x380] sm:$0xff]
  %v255 = vld [vmem:[%s3 + $0x388] sm:$0xff]
  %v256 = vld [vmem:[%s3 + $0x390] sm:$0xff]
  %v257 = vld [vmem:[%s3 + $0x398] sm:$0xff]
  %v258 = vld [vmem:[%s3 + $0x3a0] sm:$0xff]
  %v259 = vld [vmem:[%s3 + $0x3a8] sm:$0xff]
  %v260 = vld [vmem:[%s3 + $0x3b0] sm:$0xff]
  %v261 = vld [vmem:[%s3 + $0x3b8] sm:$0xff]
  %v262 = vld [vmem:[%s3 + $0x3c0] sm:$0xff]
  %v263 = vld [vmem:[%s3 + $0x3c8] sm:$0xff]
  %v264 = vld [vmem:[%s3 + $0x3d0] sm:$0xff]
  %v265 = vld [vmem:[%s3 + $0x3d8] sm:$0xff]
  %v266 = vld [vmem:[%s3 + $0x3e0] sm:$0xff]
  %v267 = vld [vmem:[%s3 + $0x3e8] sm:$0xff]
  %v268 = vld [vmem:[%s3 + $0x3f0] sm:$0xff]
  %v269 = vld [vmem:[%s3 + $0x3f8] sm:$0xff]
  %v270 = vld [vmem:[%s3 + $0x400] sm:$0xff]
  %v271 = vld [vmem:[%s3 + $0x408] sm:$0xff]
  %v272 = vld [vmem:[%s3 + $0x410] sm:$0xff]
  %v273 = vld [vmem:[%s3 + $0x418] sm:$0xff]
  %v274 = vld [vmem:[%s3 + $0x420] sm:$0xff]
  %v275 = vld [vmem:[%s3 + $0x428] sm:$0xff]
  %v276 = vld [vmem:[%s3 + $0x430] sm:$0xff]
  %v277 = vld [vmem:[%s3 + $0x438] sm:$0xff]
  %v278 = vld [vmem:[%s3 + $0x440] sm:$0xff]
  %v279 = vld [vmem:[%s3 + $0x448] sm:$0xff]
  %v280 = vld [vmem:[%s3 + $0x450] sm:$0xff]
  %v281 = vld [vmem:[%s3 + $0x458] sm:$0xff]
  %v282 = vld [vmem:[%s3 + $0x460] sm:$0xff]
  %v283 = vld [vmem:[%s3 + $0x468] sm:$0xff]
  %v284 = vld [vmem:[%s3 + $0x470] sm:$0xff]
  %v285 = vld [vmem:[%s3 + $0x478] sm:$0xff]
  %v286 = vld [vmem:[%s3 + $0x480] sm:$0xff]
  %v287 = vld [vmem:[%s3 + $0x488] sm:$0xff]
  %v288 = vld [vmem:[%s3 + $0x490] sm:$0xff]
  %v289 = vld [vmem:[%s3 + $0x498] sm:$0xff]
  %v290 = vld [vmem:[%s3 + $0x4a0] sm:$0xff]
  %v291 = vld [vmem:[%s3 + $0x4a8] sm:$0xff]
  %v292 = vld [vmem:[%s3 + $0x4b0] sm:$0xff]
  %v293 = vld [vmem:[%s3 + $0x4b8] sm:$0xff]
  %v294 = vld [vmem:[%s3 + $0x4c0] sm:$0xff]
  %v295 = vld [vmem:[%s3 + $0x4c8] sm:$0xff]
  %v296 = vld [vmem:[%s3 + $0x4d0] sm:$0xff]
  %v297 = vld [vmem:[%s3 + $0x4d8] sm:$0xff]
  %v298 = vld [vmem:[%s3 + $0x4e0] sm:$0xff]
  %v299 = vld [vmem:[%s3 + $0x4e8] sm:$0xff]
  %v300 = vld [vmem:[%s3 + $0x4f0] sm:$0xff]
  %v301 = vld [vmem:[%s3 + $0x4f8] sm:$0xff]
  %v302 = vld [vmem:[%s3 + $0x500] sm:$0xff]
  %v303 = vld [vmem:[%s3 + $0x508] sm:$0xff]
  %v304 = vld [vmem:[%s3 + $0x510] sm:$0xff]
  %v305 = vld [vmem:[%s3 + $0x518] sm:$0xff]
  %v306 = vld [vmem:[%s3 + $0x520] sm:$0xff]
  %v307 = vld [vmem:[%s3 + $0x528] sm:$0xff]
  %v308 = vld [vmem:[%s3 + $0x530] sm:$0xff]
  %v309 = vld [vmem:[%s3 + $0x538] sm:$0xff]
  %v310 = vld [vmem:[%s3 + $0x540] sm:$0xff]
  %v311 = vld [vmem:[%s3 + $0x548] sm:$0xff]
  %v312 = vld [vmem:[%s3 + $0x550] sm:$0xff]
  %v313 = vld [vmem:[%s3 + $0x558] sm:$0xff]
  %v314 = vld [vmem:[%s3 + $0x560] sm:$0xff]
  %v315 = vld [vmem:[%s3 + $0x568] sm:$0xff]
  %v316 = vld [vmem:[%s3 + $0x570] sm:$0xff]
  %v317 = vld [vmem:[%s3 + $0x578] sm:$0xff]
  %v318 = vld [vmem:[%s3 + $0x580] sm:$0xff]
  %v319 = vld [vmem:[%s3 + $0x588] sm:$0xff]
  %v320 = vld [vmem:[%s3 + $0x590] sm:$0xff]
  %v321 = vld [vmem:[%s3 + $0x598] sm:$0xff]
  %v322 = vld [vmem:[%s3 + $0x5a0] sm:$0xff]
  %v323 = vld [vmem:[%s3 + $0x5a8] sm:$0xff]
  %v324 = vld [vmem:[%s3 + $0x5b0] sm:$0xff]
  %v325 = vld [vmem:[%s3 + $0x5b8] sm:$0xff]
  %v326 = vld [vmem:[%s3 + $0x5c0] sm:$0xff]
  %v327 = vld [vmem:[%s3 + $0x5c8] sm:$0xff]
  %v328 = vld [vmem:[%s3 + $0x5d0] sm:$0xff]
  %v329 = vld [vmem:[%s3 + $0x5d8] sm:$0xff]
  %v330 = vld [vmem:[%s3 + $0x5e0] sm:$0xff]
  %v331 = vld [vmem:[%s3 + $0x5e8] sm:$0xff]
  %v332 = vld [vmem:[%s3 + $0x5f0] sm:$0xff]
  %v333 = vld [vmem:[%s3 + $0x5f8] sm:$0xff]
  %v334 = vld [vmem:[%s3 + $0x600] sm:$0xff]
  %v335 = vld [vmem:[%s3 + $0x608] sm:$0xff]
  %v336 = vld [vmem:[%s3 + $0x610] sm:$0xff]
  %v337 = vld [vmem:[%s3 + $0x618] sm:$0xff]
  %v338 = vld [vmem:[%s3 + $0x620] sm:$0xff]
  %v339 = vld [vmem:[%s3 + $0x628] sm:$0xff]
  %v340 = vld [vmem:[%s3 + $0x630] sm:$0xff]
  %v341 = vld [vmem:[%s3 + $0x638] sm:$0xff]
  %v342 = vld [vmem:[%s3 + $0x640] sm:$0xff]
  %v343 = vld [vmem:[%s3 + $0x648] sm:$0xff]
  %v344 = vld [vmem:[%s3 + $0x650] sm:$0xff]
  %v345 = vld [vmem:[%s3 + $0x658] sm:$0xff]
  %v346 = vld [vmem:[%s3 + $0x660] sm:$0xff]
  %v347 = vld [vmem:[%s3 + $0x668] sm:$0xff]
  %v348 = vld [vmem:[%s3 + $0x670] sm:$0xff]
  %v349 = vld [vmem:[%s3 + $0x678] sm:$0xff]
  %v350 = vld [vmem:[%s3 + $0x680] sm:$0xff]
  %v351 = vld [vmem:[%s3 + $0x688] sm:$0xff]
  %v352 = vld [vmem:[%s3 + $0x690] sm:$0xff]
  %v353 = vld [vmem:[%s3 + $0x698] sm:$0xff]
  %v354 = vld [vmem:[%s3 + $0x6a0] sm:$0xff]
  %v355 = vld [vmem:[%s3 + $0x6a8] sm:$0xff]
  %v356 = vld [vmem:[%s3 + $0x6b0] sm:$0xff]
  %v357 = vld [vmem:[%s3 + $0x6b8] sm:$0xff]
  %v358 = vld [vmem:[%s3 + $0x6c0] sm:$0xff]
  %v359 = vld [vmem:[%s3 + $0x6c8] sm:$0xff]
  %v360 = vld [vmem:[%s3 + $0x6d0] sm:$0xff]
  %v361 = vld [vmem:[%s3 + $0x6d8] sm:$0xff]
  %v362 = vld [vmem:[%s3 + $0x6e0] sm:$0xff]
  %v363 = vld [vmem:[%s3 + $0x6e8] sm:$0xff]
  %v364 = vld [vmem:[%s3 + $0x6f0] sm:$0xff]
  %v365 = vld [vmem:[%s3 + $0x6f8] sm:$0xff]
  %v366 = vld [vmem:[%s3 + $0x700] sm:$0xff]
  %v367 = vld [vmem:[%s3 + $0x708] sm:$0xff]
  %v368 = vld [vmem:[%s3 + $0x710] sm:$0xff]
  %v369 = vld [vmem:[%s3 + $0x718] sm:$0xff]
  %v370 = vld [vmem:[%s3 + $0x720] sm:$0xff]
  %v371 = vld [vmem:[%s3 + $0x728] sm:$0xff]
  %v372 = vld [vmem:[%s3 + $0x730] sm:$0xff]
  %v373 = vld [vmem:[%s3 + $0x738] sm:$0xff]
  %v374 = vld [vmem:[%s3 + $0x740] sm:$0xff]
  %v375 = vld [vmem:[%s3 + $0x748] sm:$0xff]
  %v376 = vld [vmem:[%s3 + $0x750] sm:$0xff]
  %v377 = vld [vmem:[%s3 + $0x758] sm:$0xff]
  %v378 = vld [vmem:[%s3 + $0x760] sm:$0xff]
  %v379 = vld [vmem:[%s3 + $0x768] sm:$0xff]
  %v380 = vld [vmem:[%s3 + $0x770] sm:$0xff]
  %v381 = vld [vmem:[%s3 + $0x778] sm:$0xff]
  %v382 = vld [vmem:[%s3 + $0x780] sm:$0xff]
  %v383 = vld [vmem:[%s3 + $0x788] sm:$0xff]
  %v384 = vld [vmem:[%s3 + $0x790] sm:$0xff]
  %v385 = vld [vmem:[%s3 + $0x798] sm:$0xff]
  %v386 = vld [vmem:[%s3 + $0x7a0] sm:$0xff]
  %v387 = vld [vmem:[%s3 + $0x7a8] sm:$0xff]
  %v388 = vld [vmem:[%s3 + $0x7b0] sm:$0xff]
  %v389 = vld [vmem:[%s3 + $0x7b8] sm:$0xff]
  %v390 = vld [vmem:[%s3 + $0x7c0] sm:$0xff]
  %v391 = vld [vmem:[%s3 + $0x7c8] sm:$0xff]
  %v392 = vld [vmem:[%s3 + $0x7d0] sm:$0xff]
  %v393 = vld [vmem:[%s3 + $0x7d8] sm:$0xff]
  %v394 = vld [vmem:[%s3 + $0x7e0] sm:$0xff]
  %v395 = vld [vmem:[%s3 + $0x7e8] sm:$0xff]
  %v396 = vld [vmem:[%s3 + $0x7f0] sm:$0xff]
  %v397 = vld [vmem:[%s3 + $0x7f8] sm:$0xff]
  %s398 = sld [smem:[#allocation2]]
  %v399 = vstv %s398
  %408 = vst [vmem:[#allocation1] ss:$2 sm:$0xff] %v134
  %s409 = scalar_lea.vmem [#allocation1], 16
  %410 = vst [vmem:[%s409] ss:$2 sm:$0xff] %v135
  %s411 = scalar_lea.vmem [#allocation1], 32
  %412 = vst [vmem:[%s411] ss:$2 sm:$0xff] %v136
  %s413 = scalar_lea.vmem [#allocation1], 48
  %414 = vst [vmem:[%s413] ss:$2 sm:$0xff] %v137
  %v415 = vld.sshfl [vmem:[#allocation1] sm:$0xff pattern:$0x75316420]
  %v416 = vld.sshfl [vmem:[#allocation1 + $0x8] sm:$0xff pattern:$0x75316420]
  %v417 = vld.sshfl [vmem:[#allocation1 + $0x10] sm:$0xff pattern:$0x75316420]
  %v418 = vld.sshfl [vmem:[#allocation1 + $0x18] sm:$0xff pattern:$0x75316420]
  %v419 = vld.sshfl [vmem:[#allocation1 + $0x20] sm:$0xff pattern:$0x75316420]
  %v420 = vld.sshfl [vmem:[#allocation1 + $0x28] sm:$0xff pattern:$0x75316420]
  %v421 = vld.sshfl [vmem:[#allocation1 + $0x30] sm:$0xff pattern:$0x75316420]
  %v422 = vld.sshfl [vmem:[#allocation1 + $0x38] sm:$0xff pattern:$0x75316420]
  %423 = vst [vmem:[#allocation1] ss:$2 sm:$0xff] %v138
  %424 = vst [vmem:[%s409] ss:$2 sm:$0xff] %v139
  %425 = vst [vmem:[%s411] ss:$2 sm:$0xff] %v140
  %426 = vst [vmem:[%s413] ss:$2 sm:$0xff] %v141
  %v427 = vld.sshfl [vmem:[#allocation1] sm:$0xff pattern:$0x75316420]
  %v428 = vld.sshfl [vmem:[#allocation1 + $0x8] sm:$0xff pattern:$0x75316420]
  %v429 = vld.sshfl [vmem:[#allocation1 + $0x10] sm:$0xff pattern:$0x75316420]
  %v430 = vld.sshfl [vmem:[#allocation1 + $0x18] sm:$0xff pattern:$0x75316420]
  %v431 = vld.sshfl [vmem:[#allocation1 + $0x20] sm:$0xff pattern:$0x75316420]
  %v432 = vld.sshfl [vmem:[#allocation1 + $0x28] sm:$0xff pattern:$0x75316420]
  %v433 = vld.sshfl [vmem:[#allocation1 + $0x30] sm:$0xff pattern:$0x75316420]
  %v434 = vld.sshfl [vmem:[#allocation1 + $0x38] sm:$0xff pattern:$0x75316420]
  %451 = vmatpush.msra.mxu0 %v157
  %452 = vmatpush.msra.mxu0 %v156
  %453 = vmatpush.msra.mxu0 %v155
  %454 = vmatpush.msra.mxu0 %v154
  %455 = vmatpush.msra.mxu0 %v153
  %456 = vmatpush.msra.mxu0 %v152
  %457 = vmatpush.msra.mxu0 %v151
  %458 = vmatpush.msra.mxu0 %v150
  %459 = vmatpush.msra.mxu0 %v149
  %460 = vmatpush.msra.mxu0 %v148
  %461 = vmatpush.msra.mxu0 %v147
  %462 = vmatpush.msra.mxu0 %v146
  %463 = vmatpush.msra.mxu0 %v145
  %464 = vmatpush.msra.mxu0 %v144
  %465 = vmatpush.msra.mxu0 %v143
  %466 = vmatpush.msra.mxu0 %v142
  %467 = vmatmul.f32.gmra.mxu0 %v415
  %v468 = vpop.f32.mrf.mxu0
  %v469 = vadd.f32 %v399, %v468
  %470 = vdwg.mxu0
  %471 = vmatpush.msra.mxu0 %v173
  %472 = vmatpush.msra.mxu0 %v172
  %473 = vmatpush.msra.mxu0 %v171
  %474 = vmatpush.msra.mxu0 %v170
  %475 = vmatpush.msra.mxu0 %v169
  %476 = vmatpush.msra.mxu0 %v168
  %477 = vmatpush.msra.mxu0 %v167
  %478 = vmatpush.msra.mxu0 %v166
  %479 = vmatpush.msra.mxu0 %v165
  %480 = vmatpush.msra.mxu0 %v164
  %481 = vmatpush.msra.mxu0 %v163
  %482 = vmatpush.msra.mxu0 %v162
  %483 = vmatpush.msra.mxu0 %v161
  %484 = vmatpush.msra.mxu0 %v160
  %485 = vmatpush.msra.mxu0 %v159
  %486 = vmatpush.msra.mxu0 %v158
  %487 = vmatmul.f32.gmra.mxu0 %v416
  %v488 = vpop.f32.mrf.mxu0
  %v489 = vadd.f32 %v469, %v488
  %490 = vdwg.mxu0
  %491 = vmatpush.msra.mxu0 %v189
  %492 = vmatpush.msra.mxu0 %v188
  %493 = vmatpush.msra.mxu0 %v187
  %494 = vmatpush.msra.mxu0 %v186
  %495 = vmatpush.msra.mxu0 %v185
  %496 = vmatpush.msra.mxu0 %v184
  %497 = vmatpush.msra.mxu0 %v183
  %498 = vmatpush.msra.mxu0 %v182
  %499 = vmatpush.msra.mxu0 %v181
  %500 = vmatpush.msra.mxu0 %v180
  %501 = vmatpush.msra.mxu0 %v179
  %502 = vmatpush.msra.mxu0 %v178
  %503 = vmatpush.msra.mxu0 %v177
  %504 = vmatpush.msra.mxu0 %v176
  %505 = vmatpush.msra.mxu0 %v175
  %506 = vmatpush.msra.mxu0 %v174
  %507 = vmatmul.f32.gmra.mxu0 %v417
  %v508 = vpop.f32.mrf.mxu0
  %v509 = vadd.f32 %v489, %v508
  %510 = vdwg.mxu0
  %511 = vmatpush.msra.mxu0 %v205
  %512 = vmatpush.msra.mxu0 %v204
  %513 = vmatpush.msra.mxu0 %v203
  %514 = vmatpush.msra.mxu0 %v202
  %515 = vmatpush.msra.mxu0 %v201
  %516 = vmatpush.msra.mxu0 %v200
  %517 = vmatpush.msra.mxu0 %v199
  %518 = vmatpush.msra.mxu0 %v198
  %519 = vmatpush.msra.mxu0 %v197
  %520 = vmatpush.msra.mxu0 %v196
  %521 = vmatpush.msra.mxu0 %v195
  %522 = vmatpush.msra.mxu0 %v194
  %523 = vmatpush.msra.mxu0 %v193
  %524 = vmatpush.msra.mxu0 %v192
  %525 = vmatpush.msra.mxu0 %v191
  %526 = vmatpush.msra.mxu0 %v190
  %527 = vmatmul.f32.gmra.mxu0 %v418
  %v528 = vpop.f32.mrf.mxu0
  %v529 = vadd.f32 %v509, %v528
  %530 = vdwg.mxu0
  %531 = vmatpush.msra.mxu0 %v221
  %532 = vmatpush.msra.mxu0 %v220
  %533 = vmatpush.msra.mxu0 %v219
  %534 = vmatpush.msra.mxu0 %v218
  %535 = vmatpush.msra.mxu0 %v217
  %536 = vmatpush.msra.mxu0 %v216
  %537 = vmatpush.msra.mxu0 %v215
  %538 = vmatpush.msra.mxu0 %v214
  %539 = vmatpush.msra.mxu0 %v213
  %540 = vmatpush.msra.mxu0 %v212
  %541 = vmatpush.msra.mxu0 %v211
  %542 = vmatpush.msra.mxu0 %v210
  %543 = vmatpush.msra.mxu0 %v209
  %544 = vmatpush.msra.mxu0 %v208
  %545 = vmatpush.msra.mxu0 %v207
  %546 = vmatpush.msra.mxu0 %v206
  %547 = vmatmul.f32.gmra.mxu0 %v419
  %v548 = vpop.f32.mrf.mxu0
  %v549 = vadd.f32 %v529, %v548
  %550 = vdwg.mxu0
  %551 = vmatpush.msra.mxu0 %v237
  %552 = vmatpush.msra.mxu0 %v236
  %553 = vmatpush.msra.mxu0 %v235
  %554 = vmatpush.msra.mxu0 %v234
  %555 = vmatpush.msra.mxu0 %v233
  %556 = vmatpush.msra.mxu0 %v232
  %557 = vmatpush.msra.mxu0 %v231
  %558 = vmatpush.msra.mxu0 %v230
  %559 = vmatpush.msra.mxu0 %v229
  %560 = vmatpush.msra.mxu0 %v228
  %561 = vmatpush.msra.mxu0 %v227
  %562 = vmatpush.msra.mxu0 %v226
  %563 = vmatpush.msra.mxu0 %v225
  %564 = vmatpush.msra.mxu0 %v224
  %565 = vmatpush.msra.mxu0 %v223
  %566 = vmatpush.msra.mxu0 %v222
  %567 = vmatmul.f32.gmra.mxu0 %v420
  %v568 = vpop.f32.mrf.mxu0
  %v569 = vadd.f32 %v549, %v568
  %570 = vdwg.mxu0
  %571 = vmatpush.msra.mxu0 %v253
  %572 = vmatpush.msra.mxu0 %v252
  %573 = vmatpush.msra.mxu0 %v251
  %574 = vmatpush.msra.mxu0 %v250
  %575 = vmatpush.msra.mxu0 %v249
  %576 = vmatpush.msra.mxu0 %v248
  %577 = vmatpush.msra.mxu0 %v247
  %578 = vmatpush.msra.mxu0 %v246
  %579 = vmatpush.msra.mxu0 %v245
  %580 = vmatpush.msra.mxu0 %v244
  %581 = vmatpush.msra.mxu0 %v243
  %582 = vmatpush.msra.mxu0 %v242
  %583 = vmatpush.msra.mxu0 %v241
  %584 = vmatpush.msra.mxu0 %v240
  %585 = vmatpush.msra.mxu0 %v239
  %586 = vmatpush.msra.mxu0 %v238
  %587 = vmatmul.f32.gmra.mxu0 %v421
  %v588 = vpop.f32.mrf.mxu0
  %v589 = vadd.f32 %v569, %v588
  %590 = vdwg.mxu0
  %591 = vmatpush.msra.mxu0 %v269
  %592 = vmatpush.msra.mxu0 %v268
  %593 = vmatpush.msra.mxu0 %v267
  %594 = vmatpush.msra.mxu0 %v266
  %595 = vmatpush.msra.mxu0 %v265
  %596 = vmatpush.msra.mxu0 %v264
  %597 = vmatpush.msra.mxu0 %v263
  %598 = vmatpush.msra.mxu0 %v262
  %599 = vmatpush.msra.mxu0 %v261
  %600 = vmatpush.msra.mxu0 %v260
  %601 = vmatpush.msra.mxu0 %v259
  %602 = vmatpush.msra.mxu0 %v258
  %603 = vmatpush.msra.mxu0 %v257
  %604 = vmatpush.msra.mxu0 %v256
  %605 = vmatpush.msra.mxu0 %v255
  %606 = vmatpush.msra.mxu0 %v254
  %607 = vmatmul.f32.gmra.mxu0 %v422
  %v608 = vpop.f32.mrf.mxu0
  %v609 = vadd.f32 %v589, %v608
  %610 = vdwg.mxu0
  %611 = vmatpush.msra.mxu0 %v285
  %612 = vmatpush.msra.mxu0 %v284
  %613 = vmatpush.msra.mxu0 %v283
  %614 = vmatpush.msra.mxu0 %v282
  %615 = vmatpush.msra.mxu0 %v281
  %616 = vmatpush.msra.mxu0 %v280
  %617 = vmatpush.msra.mxu0 %v279
  %618 = vmatpush.msra.mxu0 %v278
  %619 = vmatpush.msra.mxu0 %v277
  %620 = vmatpush.msra.mxu0 %v276
  %621 = vmatpush.msra.mxu0 %v275
  %622 = vmatpush.msra.mxu0 %v274
  %623 = vmatpush.msra.mxu0 %v273
  %624 = vmatpush.msra.mxu0 %v272
  %625 = vmatpush.msra.mxu0 %v271
  %626 = vmatpush.msra.mxu0 %v270
  %627 = vmatmul.f32.gmra.mxu0 %v427
  %v628 = vpop.f32.mrf.mxu0
  %v629 = vadd.f32 %v609, %v628
  %630 = vdwg.mxu0
  %631 = vmatpush.msra.mxu0 %v301
  %632 = vmatpush.msra.mxu0 %v300
  %633 = vmatpush.msra.mxu0 %v299
  %634 = vmatpush.msra.mxu0 %v298
  %635 = vmatpush.msra.mxu0 %v297
  %636 = vmatpush.msra.mxu0 %v296
  %637 = vmatpush.msra.mxu0 %v295
  %638 = vmatpush.msra.mxu0 %v294
  %639 = vmatpush.msra.mxu0 %v293
  %640 = vmatpush.msra.mxu0 %v292
  %641 = vmatpush.msra.mxu0 %v291
  %642 = vmatpush.msra.mxu0 %v290
  %643 = vmatpush.msra.mxu0 %v289
  %644 = vmatpush.msra.mxu0 %v288
  %645 = vmatpush.msra.mxu0 %v287
  %646 = vmatpush.msra.mxu0 %v286
  %647 = vmatmul.f32.gmra.mxu0 %v428
  %v648 = vpop.f32.mrf.mxu0
  %v649 = vadd.f32 %v629, %v648
  %650 = vdwg.mxu0
  %651 = vmatpush.msra.mxu0 %v317
  %652 = vmatpush.msra.mxu0 %v316
  %653 = vmatpush.msra.mxu0 %v315
  %654 = vmatpush.msra.mxu0 %v314
  %655 = vmatpush.msra.mxu0 %v313
  %656 = vmatpush.msra.mxu0 %v312
  %657 = vmatpush.msra.mxu0 %v311
  %658 = vmatpush.msra.mxu0 %v310
  %659 = vmatpush.msra.mxu0 %v309
  %660 = vmatpush.msra.mxu0 %v308
  %661 = vmatpush.msra.mxu0 %v307
  %662 = vmatpush.msra.mxu0 %v306
  %663 = vmatpush.msra.mxu0 %v305
  %664 = vmatpush.msra.mxu0 %v304
  %665 = vmatpush.msra.mxu0 %v303
  %666 = vmatpush.msra.mxu0 %v302
  %667 = vmatmul.f32.gmra.mxu0 %v429
  %v668 = vpop.f32.mrf.mxu0
  %v669 = vadd.f32 %v649, %v668
  %670 = vdwg.mxu0
  %671 = vmatpush.msra.mxu0 %v333
  %672 = vmatpush.msra.mxu0 %v332
  %673 = vmatpush.msra.mxu0 %v331
  %674 = vmatpush.msra.mxu0 %v330
  %675 = vmatpush.msra.mxu0 %v329
  %676 = vmatpush.msra.mxu0 %v328
  %677 = vmatpush.msra.mxu0 %v327
  %678 = vmatpush.msra.mxu0 %v326
  %679 = vmatpush.msra.mxu0 %v325
  %680 = vmatpush.msra.mxu0 %v324
  %681 = vmatpush.msra.mxu0 %v323
  %682 = vmatpush.msra.mxu0 %v322
  %683 = vmatpush.msra.mxu0 %v321
  %684 = vmatpush.msra.mxu0 %v320
  %685 = vmatpush.msra.mxu0 %v319
  %686 = vmatpush.msra.mxu0 %v318
  %687 = vmatmul.f32.gmra.mxu0 %v430
  %v688 = vpop.f32.mrf.mxu0
  %v689 = vadd.f32 %v669, %v688
  %690 = vdwg.mxu0
  %691 = vmatpush.msra.mxu0 %v349
  %692 = vmatpush.msra.mxu0 %v348
  %693 = vmatpush.msra.mxu0 %v347
  %694 = vmatpush.msra.mxu0 %v346
  %695 = vmatpush.msra.mxu0 %v345
  %696 = vmatpush.msra.mxu0 %v344
  %697 = vmatpush.msra.mxu0 %v343
  %698 = vmatpush.msra.mxu0 %v342
  %699 = vmatpush.msra.mxu0 %v341
  %700 = vmatpush.msra.mxu0 %v340
  %701 = vmatpush.msra.mxu0 %v339
  %702 = vmatpush.msra.mxu0 %v338
  %703 = vmatpush.msra.mxu0 %v337
  %704 = vmatpush.msra.mxu0 %v336
  %705 = vmatpush.msra.mxu0 %v335
  %706 = vmatpush.msra.mxu0 %v334
  %707 = vmatmul.f32.gmra.mxu0 %v431
  %v708 = vpop.f32.mrf.mxu0
  %v709 = vadd.f32 %v689, %v708
  %710 = vdwg.mxu0
  %711 = vmatpush.msra.mxu0 %v365
  %712 = vmatpush.msra.mxu0 %v364
  %713 = vmatpush.msra.mxu0 %v363
  %714 = vmatpush.msra.mxu0 %v362
  %715 = vmatpush.msra.mxu0 %v361
  %716 = vmatpush.msra.mxu0 %v360
  %717 = vmatpush.msra.mxu0 %v359
  %718 = vmatpush.msra.mxu0 %v358
  %719 = vmatpush.msra.mxu0 %v357
  %720 = vmatpush.msra.mxu0 %v356
  %721 = vmatpush.msra.mxu0 %v355
  %722 = vmatpush.msra.mxu0 %v354
  %723 = vmatpush.msra.mxu0 %v353
  %724 = vmatpush.msra.mxu0 %v352
  %725 = vmatpush.msra.mxu0 %v351
  %726 = vmatpush.msra.mxu0 %v350
  %727 = vmatmul.f32.gmra.mxu0 %v432
  %v728 = vpop.f32.mrf.mxu0
  %v729 = vadd.f32 %v709, %v728
  %730 = vdwg.mxu0
  %731 = vmatpush.msra.mxu0 %v381
  %732 = vmatpush.msra.mxu0 %v380
  %733 = vmatpush.msra.mxu0 %v379
  %734 = vmatpush.msra.mxu0 %v378
  %735 = vmatpush.msra.mxu0 %v377
  %736 = vmatpush.msra.mxu0 %v376
  %737 = vmatpush.msra.mxu0 %v375
  %738 = vmatpush.msra.mxu0 %v374
  %739 = vmatpush.msra.mxu0 %v373
  %740 = vmatpush.msra.mxu0 %v372
  %741 = vmatpush.msra.mxu0 %v371
  %742 = vmatpush.msra.mxu0 %v370
  %743 = vmatpush.msra.mxu0 %v369
  %744 = vmatpush.msra.mxu0 %v368
  %745 = vmatpush.msra.mxu0 %v367
  %746 = vmatpush.msra.mxu0 %v366
  %747 = vmatmul.f32.gmra.mxu0 %v433
  %v748 = vpop.f32.mrf.mxu0
  %v749 = vadd.f32 %v729, %v748
  %750 = vdwg.mxu0
  %751 = vmatpush.msra.mxu0 %v397
  %752 = vmatpush.msra.mxu0 %v396
  %753 = vmatpush.msra.mxu0 %v395
  %754 = vmatpush.msra.mxu0 %v394
  %755 = vmatpush.msra.mxu0 %v393
  %756 = vmatpush.msra.mxu0 %v392
  %757 = vmatpush.msra.mxu0 %v391
  %758 = vmatpush.msra.mxu0 %v390
  %759 = vmatpush.msra.mxu0 %v389
  %760 = vmatpush.msra.mxu0 %v388
  %761 = vmatpush.msra.mxu0 %v387
  %762 = vmatpush.msra.mxu0 %v386
  %763 = vmatpush.msra.mxu0 %v385
  %764 = vmatpush.msra.mxu0 %v384
  %765 = vmatpush.msra.mxu0 %v383
  %766 = vmatpush.msra.mxu0 %v382
  %767 = vmatmul.f32.gmra.mxu0 %v434
  %v768 = vpop.f32.mrf.mxu0
  %v769 = vadd.f32 %v749, %v768
  %770 = vdwg.mxu0
  %vm771 = vcmask 3072
  %772 = vst.msk [vmem:[%s5] sm:$0xf] %vm771, %v769
  // Predicated region
  $region22: #{tpu_custom_call.1} parent=0 // pred_check
    _
  $region23: #{tpu_custom_call.1} parent=0 // pred_check_branch
    %774 = sbr.rel (0) target = $region25
  $region24: #{tpu_custom_call.1} parent=0 // pred_region
    _
  $region25: #{tpu_custom_call.1} parent=0 // pred_fallthru
    _
  // Predicated region
  $region26: #{tpu_custom_call.1} parent=0 // pred_check
    _
  $region27: #{tpu_custom_call.1} parent=0 // pred_check_branch
    %776 = sbr.rel (0) target = $region29
  $region28: #{tpu_custom_call.1} parent=0 // pred_region
    _
  $region29: #{tpu_custom_call.1} parent=0 // pred_fallthru
    _

</llo_original>
